<compile_context>
chip_gen: v7x
topology: tpu7x:2x2x1
jax: 0.10.0
libtpu: 0.0.40
codegen_flags: <defaults>
</compile_context>

<pallas_src>
import functools

import jax
import jax.numpy as jnp
from jax.experimental import pallas as pl
from jax.experimental.pallas import tpu as pltpu


def _round_up(x, m):
    return (x + m - 1) // m * m


def _vmem_limit_bytes():
    """VMEM limit with headroom — never the full physical cap (matters on 64 MiB v7x)."""
    cap = None
    try:
        cap = getattr(pltpu.get_tpu_info(), "vmem_capacity_bytes", None)
    except Exception:
        cap = None
    if not cap:
        return 48 * 1024 * 1024                    # safe everywhere (v7x physical is 64 MiB)
    return int(min(cap - 16 * 1024 * 1024, 112 * 1024 * 1024))


def _derive_tb(N, F, G, D, n_drugs, in_bytes, vmem_limit, tb_cap=1024):
    """Largest multiple-of-8 batch tile that fits the VMEM budget (double-buffered)."""
    # resident operands (weight, drug table, bias tile) — count 2 buffers, worst case
    resident = 2 * 4 * (G * D + n_drugs * D + 8 * 128)
    # per-row cost: streamed (tb, F) input + (tb, 1) output (double-buffered) plus f32
    # in-kernel intermediates (cell_emb, drug, one-hot, norms)
    per_row = 2 * F * in_bytes + 2 * 4 + 4 * (2 * D + max(n_drugs, 128) + 8)
    budget = int(vmem_limit * 0.7) - resident
    tb = budget // max(per_row, 1)
    tb = max(8, min(tb, tb_cap, _round_up(N, 8)))
    # keep the grid >= 2 steps so the "parallel" axis can occupy both TCs on v7x
    if N > 8:
        tb = min(tb, _round_up(pl.cdiv(N, 2), 8))
    return max(8, (tb // 8) * 8)


def _cosine_head_kernel(row_ref, table_ref, wt_ref, b_ref, o_ref, *,
                        gene_dim, n_drugs, precision):
    """One grid step: (tb, F) raw rows -> linear + fused embedding gather -> cosine -> (tb, 1)."""
    rows = row_ref[...]                                   # (tb, F) streamed straight from input
    cell = rows[:, :gene_dim]                             # (tb, G) gene features (in-VMEM slice)
    idx = rows[:, gene_dim:gene_dim + 1].astype(jnp.int32)  # (tb, 1) drug index column

    wt = wt_ref[...]                                      # (G, D)  resident, pre-transposed
    table = table_ref[...]                                # (M, D)  resident drug table
    b = b_ref[...]                                        # (1, D)  resident f32 bias

    # cell_layer: Linear(gene_dim -> cell_dim) on the MXU, f32 accumulate.
    cell_emb = jnp.dot(cell, wt,
                       preferred_element_type=jnp.float32,
                       precision=precision) + b           # (tb, D) f32

    # nn.Embedding gather fused as one-hot @ table (MXU has enormous slack at these dims).
    onehot = (idx == jax.lax.broadcasted_iota(jnp.int32, (idx.shape[0], n_drugs), 1)
              ).astype(table.dtype)                       # (tb, M)
    drug = jnp.dot(onehot, table,
                   preferred_element_type=jnp.float32)    # (tb, D) f32, exact row copy

    # CosineSimilarity(dim=-1, eps=1e-6): num / max(||a||*||b||, eps)
    num = jnp.sum(cell_emb * drug, axis=-1, keepdims=True)
    cn = jnp.sqrt(jnp.sum(cell_emb * cell_emb, axis=-1, keepdims=True))
    dn = jnp.sqrt(jnp.sum(drug * drug, axis=-1, keepdims=True))
    denom = jnp.maximum(cn * dn, 1e-6)
    o_ref[...] = (num / denom).astype(o_ref.dtype)


def linear_model_forward(inp, cell_w, cell_b, drug_emb_w, *, tb=None):
    """Pallas forward of LinearModel.

    inp:        (B, M, gene_dim + 1); last feature column holds the drug index.
    cell_w:     (cell_dim, gene_dim)  -- PyTorch nn.Linear weight layout.
    cell_b:     (cell_dim,)
    drug_emb_w: (n_drugs, drug_dim)   -- nn.Embedding weight (drug_dim must equal cell_dim).
    Returns (B, M, 1) float32 cosine similarities.
    """
    B, M_rows, F = inp.shape
    G = F - 1
    D = cell_w.shape[0]
    n_drugs = drug_emb_w.shape[0]
    assert drug_emb_w.shape[1] == D, "cosine similarity needs cell_dim == drug_dim"

    # Free contiguous reshape only — no column slice, no gather, no pad in the wrapper.
    rows = inp.reshape(B * M_rows, F)
    N = B * M_rows

    if inp.dtype == jnp.bfloat16:
        # bf16 end-to-end: single-pass MXU with f32 accumulation (HIGHEST gains nothing
        # on data already quantized to bf16 and costs 3-6x MXU passes).
        compute_dtype = jnp.bfloat16
        precision = jax.lax.Precision.DEFAULT
    else:
        compute_dtype = jnp.float32
        precision = jax.lax.Precision.HIGHEST

    # Hoisted parameter prep (once, tiny arrays): transpose + cast for the MXU.
    wt = cell_w.astype(compute_dtype).T                   # (G, D)
    table = drug_emb_w.astype(compute_dtype)              # (M, D)
    b = cell_b.astype(jnp.float32).reshape(1, D)          # bias added post-accumulate in f32

    vmem_limit = _vmem_limit_bytes()
    if tb is None:
        tb = _derive_tb(N, F, G, D, n_drugs, inp.dtype.itemsize, vmem_limit)
    else:
        tb = max(8, min(_round_up(tb, 8), _round_up(N, 8)))

    kernel = functools.partial(_cosine_head_kernel,
                               gene_dim=G, n_drugs=n_drugs, precision=precision)

    out = pl.pallas_call(
        kernel,
        out_shape=jax.ShapeDtypeStruct((N, 1), jnp.float32),
        grid_spec=pltpu.PrefetchScalarGridSpec(
            num_scalar_prefetch=0,
            grid=(pl.cdiv(N, tb),),                       # ragged last block handled by Pallas
            in_specs=[
                pl.BlockSpec((tb, F), lambda i: (i, 0)),          # raw rows (streamed)
                pl.BlockSpec((n_drugs, D), lambda i: (0, 0)),     # drug table (resident)
                pl.BlockSpec((G, D), lambda i: (0, 0)),           # weight (resident)
                pl.BlockSpec((1, D), lambda i: (0, 0)),           # bias   (resident)
            ],
            out_specs=pl.BlockSpec((tb, 1), lambda i: (i, 0)),
        ),
        compiler_params=pltpu.CompilerParams(
            dimension_semantics=("parallel",),            # shards grid across TCs on v7x
            vmem_limit_bytes=vmem_limit,
        ),
    )(rows, table, wt, b)

    return out.reshape(B, M_rows, 1)


def reference(inp, cell_w, cell_b, drug_emb_w):
    """Pure-JAX reference of the PyTorch forward (f32)."""
    cell_fts = inp[:, :, :-1].astype(jnp.float32)
    drug_idx = inp[:, :, -1].astype(jnp.int32)
    cell_emb = jnp.einsum("bmg,dg->bmd", cell_fts, cell_w.astype(jnp.float32),
                          precision=jax.lax.Precision.HIGHEST) + cell_b.astype(jnp.float32)
    drug_emb = drug_emb_w[drug_idx].astype(jnp.float32)
    num = jnp.sum(cell_emb * drug_emb, axis=-1)
    denom = jnp.maximum(
        jnp.linalg.norm(cell_emb, axis=-1) * jnp.linalg.norm(drug_emb, axis=-1), 1e-6)
    return (num / denom)[..., None]


if __name__ == "__main__":
    # Small shapes consistent with the module: batch=2, M=8 drugs, gene_dim=64,
    # cell_dim == drug_dim = 32.  input has gene features + drug index in the last column.
    B, M, G, D = 2, 8, 64, 32

    key = jax.random.PRNGKey(0)
    k1, k2, k3, k4, k5 = jax.random.split(key, 5)

    cell_fts = jax.random.normal(k1, (B, M, G), dtype=jnp.float32)
    drug_idx = jax.random.randint(k2, (B, M), 0, M)
    inp = jnp.concatenate([cell_fts, drug_idx[..., None].astype(jnp.float32)], axis=-1)

    cell_w = jax.random.normal(k3, (D, G), dtype=jnp.float32) / jnp.sqrt(G)   # Linear weight
    cell_b = jax.random.normal(k4, (D,), dtype=jnp.float32) * 0.01            # Linear bias
    emb_w = jax.random.normal(k5, (M, D), dtype=jnp.float32)
    emb_w = emb_w / jnp.linalg.norm(emb_w, axis=-1, keepdims=True)            # max_norm=1

    out = jax.block_until_ready(linear_model_forward(inp, cell_w, cell_b, emb_w))
    ref = reference(inp, cell_w, cell_b, emb_w)

    assert out.shape == (B, M, 1)
    assert jnp.allclose(out, ref, atol=1e-4, rtol=1e-4), float(jnp.max(jnp.abs(out - ref)))
    print("KERNEL_OK")
</pallas_src>

<mosaic_0001>
module attributes {stable_mosaic.version = 11 : i64} {
  func.func @_cosine_head_kernel(%arg0: i32, %arg1: memref<8x65xf32, #tpu.memory_space<vmem>>, %arg2: memref<8x32xf32, #tpu.memory_space<vmem>>, %arg3: memref<64x32xf32, #tpu.memory_space<vmem>>, %arg4: memref<1x32xf32, #tpu.memory_space<vmem>>, %arg5: memref<8x1xf32, #tpu.memory_space<vmem>>) attributes {dimension_semantics = [#tpu.dimension_semantics<parallel>], iteration_bounds = array<i64: 2>, scalar_prefetch = 0 : i64, scratch_operands = 0 : i64, tpu.core_type = #tpu.core_type<tc>, window_params = [{transform_indices = @transform_0, window_bounds = array<i64: 8, 65>}, {pipeline_mode = #tpu.pipeline_mode<synchronous>, transform_indices = @transform_1, window_bounds = array<i64: 8, 32>}, {pipeline_mode = #tpu.pipeline_mode<synchronous>, transform_indices = @transform_2, window_bounds = array<i64: 64, 32>}, {pipeline_mode = #tpu.pipeline_mode<synchronous>, transform_indices = @transform_3, window_bounds = array<i64: 1, 32>}, {transform_indices = @transform_4, window_bounds = array<i64: 8, 1>}]} {
    %c0 = arith.constant 0 : index
    %c0_0 = arith.constant 0 : index
    %0 = vector.load %arg1[%c0, %c0_0] : memref<8x65xf32, #tpu.memory_space<vmem>>, vector<8x65xf32>
    %1 = vector.extract_strided_slice %0 {offsets = [0, 0], sizes = [8, 64], strides = [1, 1]} : vector<8x65xf32> to vector<8x64xf32>
    %2 = vector.extract_strided_slice %0 {offsets = [0, 64], sizes = [8, 1], strides = [1, 1]} : vector<8x65xf32> to vector<8x1xf32>
    %3 = arith.fptosi %2 : vector<8x1xf32> to vector<8x1xi32>
    %c0_1 = arith.constant 0 : index
    %c0_2 = arith.constant 0 : index
    %4 = vector.load %arg3[%c0_1, %c0_2] : memref<64x32xf32, #tpu.memory_space<vmem>>, vector<64x32xf32>
    %c0_3 = arith.constant 0 : index
    %c0_4 = arith.constant 0 : index
    %5 = vector.load %arg2[%c0_3, %c0_4] : memref<8x32xf32, #tpu.memory_space<vmem>>, vector<8x32xf32>
    %c0_5 = arith.constant 0 : index
    %c0_6 = arith.constant 0 : index
    %6 = vector.load %arg4[%c0_5, %c0_6] : memref<1x32xf32, #tpu.memory_space<vmem>>, vector<1x32xf32>
    %cst = arith.constant dense<0.000000e+00> : vector<8x32xf32>
    %7 = tpu.matmul %1, %4, %cst {dimension_numbers = #tpu.dot_dimension_numbers<[1], [0], [0], [1], [0, 0, 1, 1], [], []>, precision = #tpu.contract_precision<fp32>} : vector<8x64xf32>, vector<64x32xf32>, vector<8x32xf32> -> vector<8x32xf32>
    %8 = vector.broadcast %6 : vector<1x32xf32> to vector<8x32xf32>
    %9 = arith.addf %7, %8 : vector<8x32xf32>
    %10 = tpu.iota {dimensions = array<i32: 1>} : vector<8x8xi32>
    %11 = vector.broadcast %3 : vector<8x1xi32> to vector<8x8xi32>
    %12 = arith.cmpi eq, %11, %10 : vector<8x8xi32>
    %13 = arith.extui %12 : vector<8x8xi1> to vector<8x8xi32>
    %14 = arith.sitofp %13 : vector<8x8xi32> to vector<8x8xf32>
    %cst_7 = arith.constant dense<0.000000e+00> : vector<8x32xf32>
    %15 = tpu.matmul %14, %5, %cst_7 {dimension_numbers = #tpu.dot_dimension_numbers<[1], [0], [0], [1], [0, 0, 1, 1], [], []>} : vector<8x8xf32>, vector<8x32xf32>, vector<8x32xf32> -> vector<8x32xf32>
    %16 = arith.mulf %9, %15 : vector<8x32xf32>
    %cst_8 = arith.constant dense<0.000000e+00> : vector<8xf32>
    %17 = vector.multi_reduction <add>, %16, %cst_8 [1] : vector<8x32xf32> to vector<8xf32>
    %18 = vector.shape_cast %17 : vector<8xf32> to vector<8x1xf32>
    %19 = arith.mulf %9, %9 : vector<8x32xf32>
    %cst_9 = arith.constant dense<0.000000e+00> : vector<8xf32>
    %20 = vector.multi_reduction <add>, %19, %cst_9 [1] : vector<8x32xf32> to vector<8xf32>
    %21 = vector.shape_cast %20 : vector<8xf32> to vector<8x1xf32>
    %22 = math.sqrt %21 : vector<8x1xf32>
    %23 = arith.mulf %15, %15 : vector<8x32xf32>
    %cst_10 = arith.constant dense<0.000000e+00> : vector<8xf32>
    %24 = vector.multi_reduction <add>, %23, %cst_10 [1] : vector<8x32xf32> to vector<8xf32>
    %25 = vector.shape_cast %24 : vector<8xf32> to vector<8x1xf32>
    %26 = math.sqrt %25 : vector<8x1xf32>
    %27 = arith.mulf %22, %26 : vector<8x1xf32>
    %cst_11 = arith.constant 9.99999997E-7 : f32
    %28 = vector.broadcast %cst_11 : f32 to vector<8x1xf32>
    %29 = arith.maximumf %27, %28 : vector<8x1xf32>
    %30 = arith.divf %18, %29 : vector<8x1xf32>
    %c0_12 = arith.constant 0 : index
    %c0_13 = arith.constant 0 : index
    %31 = vector.load %arg5[%c0_12, %c0_13] : memref<8x1xf32, #tpu.memory_space<vmem>>, vector<8x1xf32>
    tpu.vector_store %arg5[%c0_12, %c0_13], %30 {strides = array<i32>} : memref<8x1xf32, #tpu.memory_space<vmem>>, vector<8x1xf32>,
    return
  }
  func.func @transform_0(%arg0: i32) -> (i32, i32) {
    %c0_i32 = arith.constant 0 : i32
    %c0_i32_0 = arith.constant 0 : i32
    return %arg0, %c0_i32 : i32, i32
  }
  func.func @transform_1(%arg0: i32) -> (i32, i32) {
    %c0_i32 = arith.constant 0 : i32
    %c0_i32_0 = arith.constant 0 : i32
    %c0_i32_1 = arith.constant 0 : i32
    return %c0_i32, %c0_i32_0 : i32, i32
  }
  func.func @transform_2(%arg0: i32) -> (i32, i32) {
    %c0_i32 = arith.constant 0 : i32
    %c0_i32_0 = arith.constant 0 : i32
    %c0_i32_1 = arith.constant 0 : i32
    return %c0_i32, %c0_i32_0 : i32, i32
  }
  func.func @transform_3(%arg0: i32) -> (i32, i32) {
    %c0_i32 = arith.constant 0 : i32
    %c0_i32_0 = arith.constant 0 : i32
    %c0_i32_1 = arith.constant 0 : i32
    return %c0_i32, %c0_i32_0 : i32, i32
  }
  func.func @transform_4(%arg0: i32) -> (i32, i32) {
    %c0_i32 = arith.constant 0 : i32
    %c0_i32_0 = arith.constant 0 : i32
    return %arg0, %c0_i32 : i32, i32
  }
}

</mosaic_0001>

<llo_original>
// kernel: tpu_custom_call.1
$region0: #{tpu_custom_call.1}
  #allocation0 [shape = 'u32[]', space=smem, size = 0x4, offset = 0x4, fixed_abs, tag = 'smem constant byte address 0x4 - core index']
  #allocation1 [shape = 'u32[144,128]{1,0:T(1,128)}', space=vmem, size = 0x12000, scoped, tag = 'internal scratch']
  %s0 = inlined_call_operand.vmem [shape: f32[16,65], index: 0, kind: input, shape index: {}]
  %s1 = inlined_call_operand.vmem [shape: f32[8,32], index: 1, kind: input, shape index: {}]
  %s2 = inlined_call_operand.vmem [shape: f32[64,32], index: 2, kind: input, shape index: {}]
  %s3 = inlined_call_operand.vmem [shape: f32[1,32], index: 3, kind: input, shape index: {}]
  %s4 = inlined_call_operand.vmem [shape: f32[16,1], index: 4, kind: output, shape index: {}]
  %s5 = sld [smem:[#allocation0]]
  $region49: #{tpu_custom_call.1} parent=0
    _
  %s7 = ssub.s32 1, %s5
  %s8 = scalar_select 0, %s7, %s5
  loop: start=0, step=1, limit=4
  $region2: #{tpu_custom_call.1} parent=0 // loop_pre_header
    _
  $region3: #{tpu_custom_call.1} parent=0 // loop_header
    %s10 = sphi 0, %s14
    %p11 = scmp.ge.s32.totalorder %s10, 4
    %s20 = sphi 0, %s22
    %s23 = sphi 0, %s20
    %s24 = sphi 0, %s23
    %s40 = sphi 0, %s24
    %s44 = sphi 0, %s44
    %s46 = sphi 0, %s44
    %s47 = sphi 0, %s46
    %s61 = sphi 0, %s47
    %s65 = sphi 0, %s65
    %s67 = sphi 0, %s65
    %s68 = sphi 0, %s67
    %s82 = sphi 0, %s68
    %s86 = sphi 0, %s86
    %s88 = sphi 0, %s86
    %s89 = sphi 0, %s88
    %s103 = sphi 0, %s89
    %s109 = sphi 0, %s111
    %s112 = sphi 0, %s109
    %s113 = sphi 0, %s112
    %s129 = sphi 0, %s113
  $region4: #{tpu_custom_call.1} parent=0 // loop_header_branch
    %13 = sbr.rel (%p11) target = $region8
  $region5: #{tpu_custom_call.1} parent=0 // loop_body
    %s15 = ssub.s32 %s10, 1
    %s16 = ssub.s32 %s10, 2
    %s17 = sadd.s32 %s10, 1
    %s18 = ssub.s32 %s10, %s17
    %p19 = scmp.eq.s32.totalorder %s18, 0
    %s21 = sadd.s32 %s20, 1
    %s22 = scalar_select %p19, %s20, %s21
    %p25 = pneg %p19
    %p26 = scmp.eq.s32.totalorder %s10, 1
    %p27 = por %p25, %p26
    %p28 = scmp.ne.s32.totalorder %s20, %s23
    %p29 = scmp.eq.s32.totalorder %s10, 0
    %p30 = por %p28, %p29
    %p31 = scmp.ne.s32.totalorder %s20, %s23
    %p32 = scmp.eq.s32.totalorder %s15, 1
    %p33 = por %p31, %p32
    %p34 = scmp.ne.s32.totalorder %s23, %s24
    %p35 = scmp.eq.s32.totalorder %s15, 0
    %p36 = por %p34, %p35
    %p37 = scmp.ne.s32.totalorder %s23, %s24
    %p38 = scmp.eq.s32.totalorder %s16, 1
    %p39 = por %p37, %p38
    %p41 = scmp.ne.s32.totalorder %s24, %s40
    %p42 = scmp.eq.s32.totalorder %s16, 0
    %p43 = por %p41, %p42
    %s45 = sadd.s32 %s44, 1
    %p48 = scmp.eq.s32.totalorder %s10, 1
    %p49 = scmp.ne.s32.totalorder %s44, %s46
    %p50 = scmp.eq.s32.totalorder %s10, 0
    %p51 = por %p49, %p50
    %p52 = scmp.ne.s32.totalorder %s44, %s46
    %p53 = scmp.eq.s32.totalorder %s15, 1
    %p54 = por %p52, %p53
    %p55 = scmp.ne.s32.totalorder %s46, %s47
    %p56 = scmp.eq.s32.totalorder %s15, 0
    %p57 = por %p55, %p56
    %p58 = scmp.ne.s32.totalorder %s46, %s47
    %p59 = scmp.eq.s32.totalorder %s16, 1
    %p60 = por %p58, %p59
    %p62 = scmp.ne.s32.totalorder %s47, %s61
    %p63 = scmp.eq.s32.totalorder %s16, 0
    %p64 = por %p62, %p63
    %s66 = sadd.s32 %s65, 1
    %p69 = scmp.eq.s32.totalorder %s10, 1
    %p70 = scmp.ne.s32.totalorder %s65, %s67
    %p71 = scmp.eq.s32.totalorder %s10, 0
    %p72 = por %p70, %p71
    %p73 = scmp.ne.s32.totalorder %s65, %s67
    %p74 = scmp.eq.s32.totalorder %s15, 1
    %p75 = por %p73, %p74
    %p76 = scmp.ne.s32.totalorder %s67, %s68
    %p77 = scmp.eq.s32.totalorder %s15, 0
    %p78 = por %p76, %p77
    %p79 = scmp.ne.s32.totalorder %s67, %s68
    %p80 = scmp.eq.s32.totalorder %s16, 1
    %p81 = por %p79, %p80
    %p83 = scmp.ne.s32.totalorder %s68, %s82
    %p84 = scmp.eq.s32.totalorder %s16, 0
    %p85 = por %p83, %p84
    %s87 = sadd.s32 %s86, 1
    %p90 = scmp.eq.s32.totalorder %s10, 1
    %p91 = scmp.ne.s32.totalorder %s86, %s88
    %p92 = scmp.eq.s32.totalorder %s10, 0
    %p93 = por %p91, %p92
    %p94 = scmp.ne.s32.totalorder %s86, %s88
    %p95 = scmp.eq.s32.totalorder %s15, 1
    %p96 = por %p94, %p95
    %p97 = scmp.ne.s32.totalorder %s88, %s89
    %p98 = scmp.eq.s32.totalorder %s15, 0
    %p99 = por %p97, %p98
    %p100 = scmp.ne.s32.totalorder %s88, %s89
    %p101 = scmp.eq.s32.totalorder %s16, 1
    %p102 = por %p100, %p101
    %p104 = scmp.ne.s32.totalorder %s89, %s103
    %p105 = scmp.eq.s32.totalorder %s16, 0
    %p106 = por %p104, %p105
    %s107 = ssub.s32 %s10, %s17
    %p108 = scmp.eq.s32.totalorder %s107, 0
    %s110 = sadd.s32 %s109, 1
    %s111 = scalar_select %p108, %s109, %s110
    %p114 = pneg %p108
    %p115 = scmp.eq.s32.totalorder %s10, 1
    %p116 = por %p114, %p115
    %p117 = scmp.ne.s32.totalorder %s109, %s112
    %p118 = scmp.eq.s32.totalorder %s10, 0
    %p119 = por %p117, %p118
    %p120 = scmp.ne.s32.totalorder %s109, %s112
    %p121 = scmp.eq.s32.totalorder %s15, 1
    %p122 = por %p120, %p121
    %p123 = scmp.ne.s32.totalorder %s112, %s113
    %p124 = scmp.eq.s32.totalorder %s15, 0
    %p125 = por %p123, %p124
    %p126 = scmp.ne.s32.totalorder %s112, %s113
    %p127 = scmp.eq.s32.totalorder %s16, 1
    %p128 = por %p126, %p127
    %p130 = scmp.ne.s32.totalorder %s113, %s129
    %p131 = scmp.eq.s32.totalorder %s16, 0
    %p132 = por %p130, %p131
    %p133 = scmp.le.s32.totalorder 1, %s10
    %p134 = scmp.lt.s32.totalorder %s10, 3
    %p135 = pnand %p133, %p134
    %p136 = pneg %p135
    // Predicated region
    $region9: #{tpu_custom_call.1} parent=5 // pred_check
      _
    $region10: #{tpu_custom_call.1} parent=5 // pred_check_branch
      %138 = sbr.rel (%p135) target = $region12
    $region11: #{tpu_custom_call.1} parent=5 // pred_region
      %s139 = ssub.s32 %s10, 1
      // Predicated region
      $region13: #{tpu_custom_call.1} parent=11 // pred_check
        %p140 = pneg %p57
      $region14: #{tpu_custom_call.1} parent=11 // pred_check_branch
        %142 = sbr.rel (%p140) target = $region16
      $region15: #{tpu_custom_call.1} parent=11 // pred_region
        _
      $region16: #{tpu_custom_call.1} parent=11 // pred_fallthru
        _
      // Predicated region
      $region17: #{tpu_custom_call.1} parent=11 // pred_check
        %p143 = pneg %p78
      $region18: #{tpu_custom_call.1} parent=11 // pred_check_branch
        %145 = sbr.rel (%p143) target = $region20
      $region19: #{tpu_custom_call.1} parent=11 // pred_region
        _
      $region20: #{tpu_custom_call.1} parent=11 // pred_fallthru
        _
      // Predicated region
      $region21: #{tpu_custom_call.1} parent=11 // pred_check
        %p146 = pneg %p99
      $region22: #{tpu_custom_call.1} parent=11 // pred_check_branch
        %148 = sbr.rel (%p146) target = $region24
      $region23: #{tpu_custom_call.1} parent=11 // pred_region
        _
      $region24: #{tpu_custom_call.1} parent=11 // pred_fallthru
        _
    $region12: #{tpu_custom_call.1} parent=5 // pred_fallthru
      _
    %p149 = scmp.lt.s32.totalorder %s10, 2
    // Predicated region
    $region25: #{tpu_custom_call.1} parent=5 // pred_check
      %p150 = pneg %p149
    $region26: #{tpu_custom_call.1} parent=5 // pred_check_branch
      %152 = sbr.rel (%p150) target = $region28
    $region27: #{tpu_custom_call.1} parent=5 // pred_region
      // Predicated region
      $region29: #{tpu_custom_call.1} parent=27 // pred_check
        %p153 = pneg %p30
      $region30: #{tpu_custom_call.1} parent=27 // pred_check_branch
        %155 = sbr.rel (%p153) target = $region32
      $region31: #{tpu_custom_call.1} parent=27 // pred_region
        %p156 = scmp.lt.s32.totalorder %s10, 1
        %s157 = scalar_select %p156, %s10, 1
        %s158 = smul.addr %s157, 8
        %s159 = scalar_lea.vmem %s0, %s158
      $region32: #{tpu_custom_call.1} parent=27 // pred_fallthru
        _
    $region28: #{tpu_custom_call.1} parent=5 // pred_fallthru
      _
    %p160 = scmp.le.s32.totalorder 1, %s10
    %p161 = scmp.lt.s32.totalorder %s10, 3
    %p162 = pnand %p160, %p161
    %p163 = pneg %p162
    // Predicated region
    $region33: #{tpu_custom_call.1} parent=5 // pred_check
      _
    $region34: #{tpu_custom_call.1} parent=5 // pred_check_branch
      %165 = sbr.rel (%p162) target = $region36
    $region35: #{tpu_custom_call.1} parent=5 // pred_region
      %s166 = ssub.s32 %s10, 1
      %p167 = scmp.lt.s32.totalorder %s15, 1
      %s168 = scalar_select %p167, %s15, 1
      %s169 = smul.addr %s168, 8
      %s170 = scalar_lea.vmem %s0, %s169
      %p171 = pneg %p36
      %p172 = pneg %p33
      %p173 = pneg %p57
      %p174 = pneg %p54
      %p175 = pneg %p78
      %p176 = pneg %p75
      %p177 = pneg %p99
      %p178 = pneg %p96
      %p179 = pneg %p125
      %p180 = pneg %p122
      %p181 = scmp.lt.s32.totalorder %s15, 1
      %s182 = scalar_select %p181, %s15, 1
      %s183 = smul.addr %s182, 8
      %s184 = scalar_lea.vmem %s4, %s183
      %p185 = scmp.lt.s32.totalorder %s15, 1
      %s186 = scalar_select %p185, %s15, 1
      %s187 = smul.addr %s186, 8
      %s188 = scalar_lea.vmem %s0, %s187
      %p189 = scmp.lt.s32.totalorder %s15, 1
      %s190 = scalar_select %p189, %s15, 1
      %s191 = smul.addr %s190, 8
      %s192 = scalar_lea.vmem %s4, %s191
      %v193 = vld [vmem:[%s188] sm:$0xff]
      %v194 = vcvt.f32.s32.to.zero.pseudo %v193
      %v195 = vld [vmem:[%s2] sm:$0xff]
      %v196 = vld [vmem:[%s2 + $0x8] sm:$0xff]
      %v197 = vld [vmem:[%s2 + $0x10] sm:$0xff]
      %v198 = vld [vmem:[%s2 + $0x18] sm:$0xff]
      %v199 = vld [vmem:[%s2 + $0x20] sm:$0xff]
      %v200 = vld [vmem:[%s2 + $0x28] sm:$0xff]
      %v201 = vld [vmem:[%s2 + $0x30] sm:$0xff]
      %v202 = vld [vmem:[%s2 + $0x38] sm:$0xff]
      %v203 = vld [vmem:[%s1] sm:$0xff]
      %v204 = vld [vmem:[%s3] sm:$0x1]
      %v206 = vlaneseq
      %v207 = vshrl.u32 %v206, 7
      %v208 = vsub.s32 0, %v207
      %v209 = vrot.slane %v204, %v208
      %vm211 = vcmask 523264
      %v213 = vsel %vm211, %v193, 0
      %215 = vmatprep.subr.mxu0 0.0
      %v216 = vand.u32 %v195, 4294901760
      %217 = vmatpush1.msra.mxu0 %v216
      %218 = vmatprep.subr.mxu0 0.0
      %v219 = vand.u32 %v196, 4294901760
      %220 = vmatpush1.msra.mxu0 %v219
      %221 = vmatprep.subr.mxu0 0.0
      %v222 = vand.u32 %v197, 4294901760
      %223 = vmatpush1.msra.mxu0 %v222
      %224 = vmatprep.subr.mxu0 0.0
      %v225 = vand.u32 %v198, 4294901760
      %226 = vmatpush1.msra.mxu0 %v225
      %227 = vmatprep.subr.mxu0 0.0
      %v228 = vand.u32 %v199, 4294901760
      %229 = vmatpush1.msra.mxu0 %v228
      %230 = vmatprep.subr.mxu0 0.0
      %v231 = vand.u32 %v200, 4294901760
      %232 = vmatpush1.msra.mxu0 %v231
      %233 = vmatprep.subr.mxu0 0.0
      %v234 = vand.u32 %v201, 4294901760
      %235 = vmatpush1.msra.mxu0 %v234
      %236 = vmatprep.subr.mxu0 0.0
      %v237 = vand.u32 %v202, 4294901760
      %238 = vmatpush1.msra.mxu0 %v237
      %239 = vmatprep.subr.mxu0 0.0
      %240 = vmatpush1.msra.mxu0 0.0
      %241 = vmatprep.subr.mxu0 0.0
      %242 = vmatpush1.msra.mxu0 0.0
      %243 = vmatprep.subr.mxu0 0.0
      %244 = vmatpush1.msra.mxu0 0.0
      %245 = vmatprep.subr.mxu0 0.0
      %246 = vmatpush1.msra.mxu0 0.0
      %247 = vmatprep.subr.mxu0 0.0
      %248 = vmatpush1.msra.mxu0 0.0
      %249 = vmatprep.subr.mxu0 0.0
      %250 = vmatpush1.msra.mxu0 0.0
      %251 = vmatprep.subr.mxu0 0.0
      %252 = vmatpush1.msra.mxu0 0.0
      %253 = vmatprep.subr.mxu0 0.0
      %254 = vmatpush1.msra.mxu0 0.0
      %255 = vmatprep.subr.mxu0 0.0
      %256 = vmatpush1.msra.mxu0 0.0
      %257 = vmatprep.subr.mxu0 0.0
      %258 = vmatpush1.msra.mxu0 0.0
      %259 = vmatprep.subr.mxu0 0.0
      %260 = vmatpush1.msra.mxu0 0.0
      %261 = vmatprep.subr.mxu0 0.0
      %262 = vmatpush1.msra.mxu0 0.0
      %263 = vmatprep.subr.mxu0 0.0
      %264 = vmatpush1.msra.mxu0 0.0
      %265 = vmatprep.subr.mxu0 0.0
      %266 = vmatpush1.msra.mxu0 0.0
      %267 = vmatprep.subr.mxu0 0.0
      %268 = vmatpush1.msra.mxu0 0.0
      %269 = vmatprep.subr.mxu0 0.0
      %270 = vmatpush1.msra.mxu0 0.0
      %271 = vmatprep.subr.mxu0 0.0
      %272 = vmatpush1.msra.mxu0 0.0
      %273 = vmatprep.subr.mxu0 0.0
      %274 = vmatpush1.msra.mxu0 0.0
      %275 = vmatprep.subr.mxu0 0.0
      %276 = vmatpush1.msra.mxu0 0.0
      %277 = vmatprep.subr.mxu0 0.0
      %278 = vmatpush1.msra.mxu0 0.0
      %279 = vmatprep.subr.mxu0 0.0
      %280 = vmatpush1.msra.mxu0 0.0
      %281 = vmatprep.subr.mxu0 0.0
      %282 = vmatpush1.msra.mxu0 0.0
      %283 = vmatprep.subr.mxu0 0.0
      %284 = vmatpush1.msra.mxu0 0.0
      %285 = vmatprep.subr.mxu0 0.0
      %286 = vmatpush1.msra.mxu0 0.0
      %287 = vmatprep.mubr.f32.mxu0 0.0
      %v288 = vand.u32 %v213, 4294901760
      %v289 = vsub.f32 %v213, %v288
      %v290 = vand.u32 %v289, 4294901760
      %v291 = vsub.f32 %v289, %v290
      %v292 = vand.u32 %v291, 4294901760
      %293 = vmatmul.mubr.f32.gmra.mrb[0].mxu0 %v292
      %v294 = vpop.f32.mrb[0].mxu0
      %v295 = vadd.f32 %v209, %v294
      %v296 = vpop.f32.mrb[0].mxu0
      %297 = vdwg.mxu0
      %298 = vmatprep.subr.mxu0 0.0
      %v299 = vand.u32 %v195, 4294901760
      %v300 = vsub.f32 %v195, %v299
      %v301 = vand.u32 %v300, 4294901760
      %v302 = vsub.f32 %v300, %v301
      %v303 = vand.u32 %v302, 4294901760
      %304 = vmatpush1.msra.mxu0 %v303
      %305 = vmatprep.subr.mxu0 0.0
      %v306 = vand.u32 %v196, 4294901760
      %v307 = vsub.f32 %v196, %v306
      %v308 = vand.u32 %v307, 4294901760
      %v309 = vsub.f32 %v307, %v308
      %v310 = vand.u32 %v309, 4294901760
      %311 = vmatpush1.msra.mxu0 %v310
      %312 = vmatprep.subr.mxu0 0.0
      %v313 = vand.u32 %v197, 4294901760
      %v314 = vsub.f32 %v197, %v313
      %v315 = vand.u32 %v314, 4294901760
      %v316 = vsub.f32 %v314, %v315
      %v317 = vand.u32 %v316, 4294901760
      %318 = vmatpush1.msra.mxu0 %v317
      %319 = vmatprep.subr.mxu0 0.0
      %v320 = vand.u32 %v198, 4294901760
      %v321 = vsub.f32 %v198, %v320
      %v322 = vand.u32 %v321, 4294901760
      %v323 = vsub.f32 %v321, %v322
      %v324 = vand.u32 %v323, 4294901760
      %325 = vmatpush1.msra.mxu0 %v324
      %326 = vmatprep.subr.mxu0 0.0
      %v327 = vand.u32 %v199, 4294901760
      %v328 = vsub.f32 %v199, %v327
      %v329 = vand.u32 %v328, 4294901760
      %v330 = vsub.f32 %v328, %v329
      %v331 = vand.u32 %v330, 4294901760
      %332 = vmatpush1.msra.mxu0 %v331
      %333 = vmatprep.subr.mxu0 0.0
      %v334 = vand.u32 %v200, 4294901760
      %v335 = vsub.f32 %v200, %v334
      %v336 = vand.u32 %v335, 4294901760
      %v337 = vsub.f32 %v335, %v336
      %v338 = vand.u32 %v337, 4294901760
      %339 = vmatpush1.msra.mxu0 %v338
      %340 = vmatprep.subr.mxu0 0.0
      %v341 = vand.u32 %v201, 4294901760
      %v342 = vsub.f32 %v201, %v341
      %v343 = vand.u32 %v342, 4294901760
      %v344 = vsub.f32 %v342, %v343
      %v345 = vand.u32 %v344, 4294901760
      %346 = vmatpush1.msra.mxu0 %v345
      %347 = vmatprep.subr.mxu0 0.0
      %v348 = vand.u32 %v202, 4294901760
      %v349 = vsub.f32 %v202, %v348
      %v350 = vand.u32 %v349, 4294901760
      %v351 = vsub.f32 %v349, %v350
      %v352 = vand.u32 %v351, 4294901760
      %353 = vmatpush1.msra.mxu0 %v352
      %354 = vmatprep.subr.mxu0 0.0
      %355 = vmatpush1.msra.mxu0 0.0
      %356 = vmatprep.subr.mxu0 0.0
      %357 = vmatpush1.msra.mxu0 0.0
      %358 = vmatprep.subr.mxu0 0.0
      %359 = vmatpush1.msra.mxu0 0.0
      %360 = vmatprep.subr.mxu0 0.0
      %361 = vmatpush1.msra.mxu0 0.0
      %362 = vmatprep.subr.mxu0 0.0
      %363 = vmatpush1.msra.mxu0 0.0
      %364 = vmatprep.subr.mxu0 0.0
      %365 = vmatpush1.msra.mxu0 0.0
      %366 = vmatprep.subr.mxu0 0.0
      %367 = vmatpush1.msra.mxu0 0.0
      %368 = vmatprep.subr.mxu0 0.0
      %369 = vmatpush1.msra.mxu0 0.0
      %370 = vmatprep.subr.mxu0 0.0
      %371 = vmatpush1.msra.mxu0 0.0
      %372 = vmatprep.subr.mxu0 0.0
      %373 = vmatpush1.msra.mxu0 0.0
      %374 = vmatprep.subr.mxu0 0.0
      %375 = vmatpush1.msra.mxu0 0.0
      %376 = vmatprep.subr.mxu0 0.0
      %377 = vmatpush1.msra.mxu0 0.0
      %378 = vmatprep.subr.mxu0 0.0
      %379 = vmatpush1.msra.mxu0 0.0
      %380 = vmatprep.subr.mxu0 0.0
      %381 = vmatpush1.msra.mxu0 0.0
      %382 = vmatprep.subr.mxu0 0.0
      %383 = vmatpush1.msra.mxu0 0.0
      %384 = vmatprep.subr.mxu0 0.0
      %385 = vmatpush1.msra.mxu0 0.0
      %386 = vmatprep.subr.mxu0 0.0
      %387 = vmatpush1.msra.mxu0 0.0
      %388 = vmatprep.subr.mxu0 0.0
      %389 = vmatpush1.msra.mxu0 0.0
      %390 = vmatprep.subr.mxu0 0.0
      %391 = vmatpush1.msra.mxu0 0.0
      %392 = vmatprep.subr.mxu0 0.0
      %393 = vmatpush1.msra.mxu0 0.0
      %394 = vmatprep.subr.mxu0 0.0
      %395 = vmatpush1.msra.mxu0 0.0
      %396 = vmatprep.subr.mxu0 0.0
      %397 = vmatpush1.msra.mxu0 0.0
      %398 = vmatprep.subr.mxu0 0.0
      %399 = vmatpush1.msra.mxu0 0.0
      %400 = vmatprep.subr.mxu0 0.0
      %401 = vmatpush1.msra.mxu0 0.0
      %402 = vmatprep.mubr.f32.mxu0 0.0
      %v403 = vand.u32 %v213, 4294901760
      %404 = vmatmul.mubr.f32.gmra.mrb[0].mxu0 %v403
      %v405 = vpop.f32.mrb[0].mxu0
      %v406 = vadd.f32 %v295, %v405
      %v407 = vpop.f32.mrb[0].mxu0
      %408 = vdwg.mxu0
      %409 = vmatprep.subr.mxu0 0.0
      %v410 = vand.u32 %v195, 4294901760
      %v411 = vsub.f32 %v195, %v410
      %412 = vmatpush1.msra.mxu0 %v411
      %413 = vmatprep.subr.mxu0 0.0
      %v414 = vand.u32 %v196, 4294901760
      %v415 = vsub.f32 %v196, %v414
      %416 = vmatpush1.msra.mxu0 %v415
      %417 = vmatprep.subr.mxu0 0.0
      %v418 = vand.u32 %v197, 4294901760
      %v419 = vsub.f32 %v197, %v418
      %420 = vmatpush1.msra.mxu0 %v419
      %421 = vmatprep.subr.mxu0 0.0
      %v422 = vand.u32 %v198, 4294901760
      %v423 = vsub.f32 %v198, %v422
      %424 = vmatpush1.msra.mxu0 %v423
      %425 = vmatprep.subr.mxu0 0.0
      %v426 = vand.u32 %v199, 4294901760
      %v427 = vsub.f32 %v199, %v426
      %428 = vmatpush1.msra.mxu0 %v427
      %429 = vmatprep.subr.mxu0 0.0
      %v430 = vand.u32 %v200, 4294901760
      %v431 = vsub.f32 %v200, %v430
      %432 = vmatpush1.msra.mxu0 %v431
      %433 = vmatprep.subr.mxu0 0.0
      %v434 = vand.u32 %v201, 4294901760
      %v435 = vsub.f32 %v201, %v434
      %436 = vmatpush1.msra.mxu0 %v435
      %437 = vmatprep.subr.mxu0 0.0
      %v438 = vand.u32 %v202, 4294901760
      %v439 = vsub.f32 %v202, %v438
      %440 = vmatpush1.msra.mxu0 %v439
      %441 = vmatprep.subr.mxu0 0.0
      %442 = vmatpush1.msra.mxu0 0.0
      %443 = vmatprep.subr.mxu0 0.0
      %444 = vmatpush1.msra.mxu0 0.0
      %445 = vmatprep.subr.mxu0 0.0
      %446 = vmatpush1.msra.mxu0 0.0
      %447 = vmatprep.subr.mxu0 0.0
      %448 = vmatpush1.msra.mxu0 0.0
      %449 = vmatprep.subr.mxu0 0.0
      %450 = vmatpush1.msra.mxu0 0.0
      %451 = vmatprep.subr.mxu0 0.0
      %452 = vmatpush1.msra.mxu0 0.0
      %453 = vmatprep.subr.mxu0 0.0
      %454 = vmatpush1.msra.mxu0 0.0
      %455 = vmatprep.subr.mxu0 0.0
      %456 = vmatpush1.msra.mxu0 0.0
      %457 = vmatprep.subr.mxu0 0.0
      %458 = vmatpush1.msra.mxu0 0.0
      %459 = vmatprep.subr.mxu0 0.0
      %460 = vmatpush1.msra.mxu0 0.0
      %461 = vmatprep.subr.mxu0 0.0
      %462 = vmatpush1.msra.mxu0 0.0
      %463 = vmatprep.subr.mxu0 0.0
      %464 = vmatpush1.msra.mxu0 0.0
      %465 = vmatprep.subr.mxu0 0.0
      %466 = vmatpush1.msra.mxu0 0.0
      %467 = vmatprep.subr.mxu0 0.0
      %468 = vmatpush1.msra.mxu0 0.0
      %469 = vmatprep.subr.mxu0 0.0
      %470 = vmatpush1.msra.mxu0 0.0
      %471 = vmatprep.subr.mxu0 0.0
      %472 = vmatpush1.msra.mxu0 0.0
      %473 = vmatprep.subr.mxu0 0.0
      %474 = vmatpush1.msra.mxu0 0.0
      %475 = vmatprep.subr.mxu0 0.0
      %476 = vmatpush1.msra.mxu0 0.0
      %477 = vmatprep.subr.mxu0 0.0
      %478 = vmatpush1.msra.mxu0 0.0
      %479 = vmatprep.subr.mxu0 0.0
      %480 = vmatpush1.msra.mxu0 0.0
      %481 = vmatprep.subr.mxu0 0.0
      %482 = vmatpush1.msra.mxu0 0.0
      %483 = vmatprep.subr.mxu0 0.0
      %484 = vmatpush1.msra.mxu0 0.0
      %485 = vmatprep.subr.mxu0 0.0
      %486 = vmatpush1.msra.mxu0 0.0
      %487 = vmatprep.subr.mxu0 0.0
      %488 = vmatpush1.msra.mxu0 0.0
      %489 = vmatprep.mubr.f32.mxu0 0.0
      %v490 = vand.u32 %v213, 4294901760
      %v491 = vsub.f32 %v213, %v490
      %492 = vmatmul.mubr.f32.gmra.mrb[0].mxu0 %v491
      %v493 = vpop.f32.mrb[0].mxu0
      %v494 = vadd.f32 %v406, %v493
      %v495 = vpop.f32.mrb[0].mxu0
      %496 = vdwg.mxu0
      %497 = vmatprep.subr.mxu0 0.0
      %v498 = vand.u32 %v195, 4294901760
      %499 = vmatpush1.msra.mxu0 %v498
      %500 = vmatprep.subr.mxu0 0.0
      %v501 = vand.u32 %v196, 4294901760
      %502 = vmatpush1.msra.mxu0 %v501
      %503 = vmatprep.subr.mxu0 0.0
      %v504 = vand.u32 %v197, 4294901760
      %505 = vmatpush1.msra.mxu0 %v504
      %506 = vmatprep.subr.mxu0 0.0
      %v507 = vand.u32 %v198, 4294901760
      %508 = vmatpush1.msra.mxu0 %v507
      %509 = vmatprep.subr.mxu0 0.0
      %v510 = vand.u32 %v199, 4294901760
      %511 = vmatpush1.msra.mxu0 %v510
      %512 = vmatprep.subr.mxu0 0.0
      %v513 = vand.u32 %v200, 4294901760
      %514 = vmatpush1.msra.mxu0 %v513
      %515 = vmatprep.subr.mxu0 0.0
      %v516 = vand.u32 %v201, 4294901760
      %517 = vmatpush1.msra.mxu0 %v516
      %518 = vmatprep.subr.mxu0 0.0
      %v519 = vand.u32 %v202, 4294901760
      %520 = vmatpush1.msra.mxu0 %v519
      %521 = vmatprep.subr.mxu0 0.0
      %522 = vmatpush1.msra.mxu0 0.0
      %523 = vmatprep.subr.mxu0 0.0
      %524 = vmatpush1.msra.mxu0 0.0
      %525 = vmatprep.subr.mxu0 0.0
      %526 = vmatpush1.msra.mxu0 0.0
      %527 = vmatprep.subr.mxu0 0.0
      %528 = vmatpush1.msra.mxu0 0.0
      %529 = vmatprep.subr.mxu0 0.0
      %530 = vmatpush1.msra.mxu0 0.0
      %531 = vmatprep.subr.mxu0 0.0
      %532 = vmatpush1.msra.mxu0 0.0
      %533 = vmatprep.subr.mxu0 0.0
      %534 = vmatpush1.msra.mxu0 0.0
      %535 = vmatprep.subr.mxu0 0.0
      %536 = vmatpush1.msra.mxu0 0.0
      %537 = vmatprep.subr.mxu0 0.0
      %538 = vmatpush1.msra.mxu0 0.0
      %539 = vmatprep.subr.mxu0 0.0
      %540 = vmatpush1.msra.mxu0 0.0
      %541 = vmatprep.subr.mxu0 0.0
      %542 = vmatpush1.msra.mxu0 0.0
      %543 = vmatprep.subr.mxu0 0.0
      %544 = vmatpush1.msra.mxu0 0.0
      %545 = vmatprep.subr.mxu0 0.0
      %546 = vmatpush1.msra.mxu0 0.0
      %547 = vmatprep.subr.mxu0 0.0
      %548 = vmatpush1.msra.mxu0 0.0
      %549 = vmatprep.subr.mxu0 0.0
      %550 = vmatpush1.msra.mxu0 0.0
      %551 = vmatprep.subr.mxu0 0.0
      %552 = vmatpush1.msra.mxu0 0.0
      %553 = vmatprep.subr.mxu0 0.0
      %554 = vmatpush1.msra.mxu0 0.0
      %555 = vmatprep.subr.mxu0 0.0
      %556 = vmatpush1.msra.mxu0 0.0
      %557 = vmatprep.subr.mxu0 0.0
      %558 = vmatpush1.msra.mxu0 0.0
      %559 = vmatprep.subr.mxu0 0.0
      %560 = vmatpush1.msra.mxu0 0.0
      %561 = vmatprep.subr.mxu0 0.0
      %562 = vmatpush1.msra.mxu0 0.0
      %563 = vmatprep.subr.mxu0 0.0
      %564 = vmatpush1.msra.mxu0 0.0
      %565 = vmatprep.subr.mxu0 0.0
      %566 = vmatpush1.msra.mxu0 0.0
      %567 = vmatprep.subr.mxu0 0.0
      %568 = vmatpush1.msra.mxu0 0.0
      %569 = vmatprep.mubr.f32.mxu0 0.0
      %v570 = vand.u32 %v213, 4294901760
      %v571 = vsub.f32 %v213, %v570
      %v572 = vand.u32 %v571, 4294901760
      %573 = vmatmul.mubr.f32.gmra.mrb[0].mxu0 %v572
      %v574 = vpop.f32.mrb[0].mxu0
      %v575 = vadd.f32 %v494, %v574
      %v576 = vpop.f32.mrb[0].mxu0
      %577 = vdwg.mxu0
      %578 = vmatprep.subr.mxu0 0.0
      %v579 = vand.u32 %v195, 4294901760
      %v580 = vsub.f32 %v195, %v579
      %v581 = vand.u32 %v580, 4294901760
      %582 = vmatpush1.msra.mxu0 %v581
      %583 = vmatprep.subr.mxu0 0.0
      %v584 = vand.u32 %v196, 4294901760
      %v585 = vsub.f32 %v196, %v584
      %v586 = vand.u32 %v585, 4294901760
      %587 = vmatpush1.msra.mxu0 %v586
      %588 = vmatprep.subr.mxu0 0.0
      %v589 = vand.u32 %v197, 4294901760
      %v590 = vsub.f32 %v197, %v589
      %v591 = vand.u32 %v590, 4294901760
      %592 = vmatpush1.msra.mxu0 %v591
      %593 = vmatprep.subr.mxu0 0.0
      %v594 = vand.u32 %v198, 4294901760
      %v595 = vsub.f32 %v198, %v594
      %v596 = vand.u32 %v595, 4294901760
      %597 = vmatpush1.msra.mxu0 %v596
      %598 = vmatprep.subr.mxu0 0.0
      %v599 = vand.u32 %v199, 4294901760
      %v600 = vsub.f32 %v199, %v599
      %v601 = vand.u32 %v600, 4294901760
      %602 = vmatpush1.msra.mxu0 %v601
      %603 = vmatprep.subr.mxu0 0.0
      %v604 = vand.u32 %v200, 4294901760
      %v605 = vsub.f32 %v200, %v604
      %v606 = vand.u32 %v605, 4294901760
      %607 = vmatpush1.msra.mxu0 %v606
      %608 = vmatprep.subr.mxu0 0.0
      %v609 = vand.u32 %v201, 4294901760
      %v610 = vsub.f32 %v201, %v609
      %v611 = vand.u32 %v610, 4294901760
      %612 = vmatpush1.msra.mxu0 %v611
      %613 = vmatprep.subr.mxu0 0.0
      %v614 = vand.u32 %v202, 4294901760
      %v615 = vsub.f32 %v202, %v614
      %v616 = vand.u32 %v615, 4294901760
      %617 = vmatpush1.msra.mxu0 %v616
      %618 = vmatprep.subr.mxu0 0.0
      %619 = vmatpush1.msra.mxu0 0.0
      %620 = vmatprep.subr.mxu0 0.0
      %621 = vmatpush1.msra.mxu0 0.0
      %622 = vmatprep.subr.mxu0 0.0
      %623 = vmatpush1.msra.mxu0 0.0
      %624 = vmatprep.subr.mxu0 0.0
      %625 = vmatpush1.msra.mxu0 0.0
      %626 = vmatprep.subr.mxu0 0.0
      %627 = vmatpush1.msra.mxu0 0.0
      %628 = vmatprep.subr.mxu0 0.0
      %629 = vmatpush1.msra.mxu0 0.0
      %630 = vmatprep.subr.mxu0 0.0
      %631 = vmatpush1.msra.mxu0 0.0
      %632 = vmatprep.subr.mxu0 0.0
      %633 = vmatpush1.msra.mxu0 0.0
      %634 = vmatprep.subr.mxu0 0.0
      %635 = vmatpush1.msra.mxu0 0.0
      %636 = vmatprep.subr.mxu0 0.0
      %637 = vmatpush1.msra.mxu0 0.0
      %638 = vmatprep.subr.mxu0 0.0
      %639 = vmatpush1.msra.mxu0 0.0
      %640 = vmatprep.subr.mxu0 0.0
      %641 = vmatpush1.msra.mxu0 0.0
      %642 = vmatprep.subr.mxu0 0.0
      %643 = vmatpush1.msra.mxu0 0.0
      %644 = vmatprep.subr.mxu0 0.0
      %645 = vmatpush1.msra.mxu0 0.0
      %646 = vmatprep.subr.mxu0 0.0
      %647 = vmatpush1.msra.mxu0 0.0
      %648 = vmatprep.subr.mxu0 0.0
      %649 = vmatpush1.msra.mxu0 0.0
      %650 = vmatprep.subr.mxu0 0.0
      %651 = vmatpush1.msra.mxu0 0.0
      %652 = vmatprep.subr.mxu0 0.0
      %653 = vmatpush1.msra.mxu0 0.0
      %654 = vmatprep.subr.mxu0 0.0
      %655 = vmatpush1.msra.mxu0 0.0
      %656 = vmatprep.subr.mxu0 0.0
      %657 = vmatpush1.msra.mxu0 0.0
      %658 = vmatprep.subr.mxu0 0.0
      %659 = vmatpush1.msra.mxu0 0.0
      %660 = vmatprep.subr.mxu0 0.0
      %661 = vmatpush1.msra.mxu0 0.0
      %662 = vmatprep.subr.mxu0 0.0
      %663 = vmatpush1.msra.mxu0 0.0
      %664 = vmatprep.subr.mxu0 0.0
      %665 = vmatpush1.msra.mxu0 0.0
      %666 = vmatprep.mubr.f32.mxu0 0.0
      %v667 = vand.u32 %v213, 4294901760
      %668 = vmatmul.mubr.f32.gmra.mrb[0].mxu0 %v667
      %v669 = vpop.f32.mrb[0].mxu0
      %v670 = vadd.f32 %v575, %v669
      %v671 = vpop.f32.mrb[0].mxu0
      %672 = vdwg.mxu0
      %673 = vmatprep.subr.mxu0 0.0
      %v674 = vand.u32 %v195, 4294901760
      %675 = vmatpush1.msra.mxu0 %v674
      %676 = vmatprep.subr.mxu0 0.0
      %v677 = vand.u32 %v196, 4294901760
      %678 = vmatpush1.msra.mxu0 %v677
      %679 = vmatprep.subr.mxu0 0.0
      %v680 = vand.u32 %v197, 4294901760
      %681 = vmatpush1.msra.mxu0 %v680
      %682 = vmatprep.subr.mxu0 0.0
      %v683 = vand.u32 %v198, 4294901760
      %684 = vmatpush1.msra.mxu0 %v683
      %685 = vmatprep.subr.mxu0 0.0
      %v686 = vand.u32 %v199, 4294901760
      %687 = vmatpush1.msra.mxu0 %v686
      %688 = vmatprep.subr.mxu0 0.0
      %v689 = vand.u32 %v200, 4294901760
      %690 = vmatpush1.msra.mxu0 %v689
      %691 = vmatprep.subr.mxu0 0.0
      %v692 = vand.u32 %v201, 4294901760
      %693 = vmatpush1.msra.mxu0 %v692
      %694 = vmatprep.subr.mxu0 0.0
      %v695 = vand.u32 %v202, 4294901760
      %696 = vmatpush1.msra.mxu0 %v695
      %697 = vmatprep.subr.mxu0 0.0
      %698 = vmatpush1.msra.mxu0 0.0
      %699 = vmatprep.subr.mxu0 0.0
      %700 = vmatpush1.msra.mxu0 0.0
      %701 = vmatprep.subr.mxu0 0.0
      %702 = vmatpush1.msra.mxu0 0.0
      %703 = vmatprep.subr.mxu0 0.0
      %704 = vmatpush1.msra.mxu0 0.0
      %705 = vmatprep.subr.mxu0 0.0
      %706 = vmatpush1.msra.mxu0 0.0
      %707 = vmatprep.subr.mxu0 0.0
      %708 = vmatpush1.msra.mxu0 0.0
      %709 = vmatprep.subr.mxu0 0.0
      %710 = vmatpush1.msra.mxu0 0.0
      %711 = vmatprep.subr.mxu0 0.0
      %712 = vmatpush1.msra.mxu0 0.0
      %713 = vmatprep.subr.mxu0 0.0
      %714 = vmatpush1.msra.mxu0 0.0
      %715 = vmatprep.subr.mxu0 0.0
      %716 = vmatpush1.msra.mxu0 0.0
      %717 = vmatprep.subr.mxu0 0.0
      %718 = vmatpush1.msra.mxu0 0.0
      %719 = vmatprep.subr.mxu0 0.0
      %720 = vmatpush1.msra.mxu0 0.0
      %721 = vmatprep.subr.mxu0 0.0
      %722 = vmatpush1.msra.mxu0 0.0
      %723 = vmatprep.subr.mxu0 0.0
      %724 = vmatpush1.msra.mxu0 0.0
      %725 = vmatprep.subr.mxu0 0.0
      %726 = vmatpush1.msra.mxu0 0.0
      %727 = vmatprep.subr.mxu0 0.0
      %728 = vmatpush1.msra.mxu0 0.0
      %729 = vmatprep.subr.mxu0 0.0
      %730 = vmatpush1.msra.mxu0 0.0
      %731 = vmatprep.subr.mxu0 0.0
      %732 = vmatpush1.msra.mxu0 0.0
      %733 = vmatprep.subr.mxu0 0.0
      %734 = vmatpush1.msra.mxu0 0.0
      %735 = vmatprep.subr.mxu0 0.0
      %736 = vmatpush1.msra.mxu0 0.0
      %737 = vmatprep.subr.mxu0 0.0
      %738 = vmatpush1.msra.mxu0 0.0
      %739 = vmatprep.subr.mxu0 0.0
      %740 = vmatpush1.msra.mxu0 0.0
      %741 = vmatprep.subr.mxu0 0.0
      %742 = vmatpush1.msra.mxu0 0.0
      %743 = vmatprep.subr.mxu0 0.0
      %744 = vmatpush1.msra.mxu0 0.0
      %745 = vmatprep.mubr.f32.mxu0 0.0
      %v746 = vand.u32 %v213, 4294901760
      %747 = vmatmul.mubr.f32.gmra.mrb[0].mxu0 %v746
      %v748 = vpop.f32.mrb[0].mxu0
      %v749 = vadd.f32 %v670, %v748
      %v750 = vpop.f32.mrb[0].mxu0
      %751 = vdwg.mxu0
      %v752 = vlaneseq
      %v753 = vand.u32 %v752, 127
      %754 = vset.pattern.permute.xlu0 64
      %755 = vperm.xlu0 %754, %v194
      %v756 = vpop.permute.xlu0 %755
      %vm757 = vcmp.eq.s32.totalorder %v756, %v753
      %v758 = vsel %vm757, 1, 0
      %v759 = vcvt.s32.f32 %v758
      %vm760 = vcmask 64512
      %v762 = vsel %vm760, %v759, 0
      %764 = vmatprep.subr.mxu0 0.0
      %765 = vmatpush1.msra.mxu0 %v203
      %766 = vmatprep.subr.mxu0 0.0
      %767 = vmatpush1.msra.mxu0 0.0
      %768 = vmatprep.subr.mxu0 0.0
      %769 = vmatpush1.msra.mxu0 0.0
      %770 = vmatprep.subr.mxu0 0.0
      %771 = vmatpush1.msra.mxu0 0.0
      %772 = vmatprep.subr.mxu0 0.0
      %773 = vmatpush1.msra.mxu0 0.0
      %774 = vmatprep.subr.mxu0 0.0
      %775 = vmatpush1.msra.mxu0 0.0
      %776 = vmatprep.subr.mxu0 0.0
      %777 = vmatpush1.msra.mxu0 0.0
      %778 = vmatprep.subr.mxu0 0.0
      %779 = vmatpush1.msra.mxu0 0.0
      %780 = vmatprep.subr.mxu0 0.0
      %781 = vmatpush1.msra.mxu0 0.0
      %782 = vmatprep.subr.mxu0 0.0
      %783 = vmatpush1.msra.mxu0 0.0
      %784 = vmatprep.subr.mxu0 0.0
      %785 = vmatpush1.msra.mxu0 0.0
      %786 = vmatprep.subr.mxu0 0.0
      %787 = vmatpush1.msra.mxu0 0.0
      %788 = vmatprep.subr.mxu0 0.0
      %789 = vmatpush1.msra.mxu0 0.0
      %790 = vmatprep.subr.mxu0 0.0
      %791 = vmatpush1.msra.mxu0 0.0
      %792 = vmatprep.subr.mxu0 0.0
      %793 = vmatpush1.msra.mxu0 0.0
      %794 = vmatprep.subr.mxu0 0.0
      %795 = vmatpush1.msra.mxu0 0.0
      %796 = vmatprep.subr.mxu0 0.0
      %797 = vmatpush1.msra.mxu0 0.0
      %798 = vmatprep.subr.mxu0 0.0
      %799 = vmatpush1.msra.mxu0 0.0
      %800 = vmatprep.subr.mxu0 0.0
      %801 = vmatpush1.msra.mxu0 0.0
      %802 = vmatprep.subr.mxu0 0.0
      %803 = vmatpush1.msra.mxu0 0.0
      %804 = vmatprep.subr.mxu0 0.0
      %805 = vmatpush1.msra.mxu0 0.0
      %806 = vmatprep.subr.mxu0 0.0
      %807 = vmatpush1.msra.mxu0 0.0
      %808 = vmatprep.subr.mxu0 0.0
      %809 = vmatpush1.msra.mxu0 0.0
      %810 = vmatprep.subr.mxu0 0.0
      %811 = vmatpush1.msra.mxu0 0.0
      %812 = vmatprep.subr.mxu0 0.0
      %813 = vmatpush1.msra.mxu0 0.0
      %814 = vmatprep.subr.mxu0 0.0
      %815 = vmatpush1.msra.mxu0 0.0
      %816 = vmatprep.subr.mxu0 0.0
      %817 = vmatpush1.msra.mxu0 0.0
      %818 = vmatprep.subr.mxu0 0.0
      %819 = vmatpush1.msra.mxu0 0.0
      %820 = vmatprep.subr.mxu0 0.0
      %821 = vmatpush1.msra.mxu0 0.0
      %822 = vmatprep.subr.mxu0 0.0
      %823 = vmatpush1.msra.mxu0 0.0
      %824 = vmatprep.subr.mxu0 0.0
      %825 = vmatpush1.msra.mxu0 0.0
      %826 = vmatprep.subr.mxu0 0.0
      %827 = vmatpush1.msra.mxu0 0.0
      %828 = vmatprep.mubr.f32.mxu0 0.0
      %829 = vmatmul.mubr.f32.gmra.mrb[0].mxu0 %v762
      %v830 = vpop.f32.mrb[0].mxu0
      %v831 = vadd.f32 0.0, %v830
      %v832 = vpop.f32.mrb[0].mxu0
      %833 = vdwg.mxu0
      %v834 = vmul.f32 %v749, %v831
      %vm835 = vcmask 261120
      %v836 = vsel %vm835, %v834, 0.0
      %837 = vadd.xlane.f32.xlu0 %v836
      %v838 = vpop.xlane.xlu0 %837
      %v839 = vmul.f32 %v749, %v749
      %v840 = vsel %vm835, %v839, 0.0
      %841 = vadd.xlane.f32.xlu0 %v840
      %v842 = vpop.xlane.xlu0 %841
      %v843 = vrsqrt.pop %v842
      %v844 = vmul.f32 %v842, %v843
      %vm845 = vcmp.eq.f32.partialorder %v842, inf
      %v846 = vsel %vm845, %v842, %v844
      %vm847 = vcmp.eq.f32.partialorder %v842, 0.0
      %v848 = vand.u32 %v842, 2147483648
      %v849 = vsel %vm847, %v848, %v846
      %v850 = vmul.f32 %v831, %v831
      %v851 = vsel %vm835, %v850, 0.0
      %852 = vadd.xlane.f32.xlu0 %v851
      %v853 = vpop.xlane.xlu0 %852
      %v854 = vrsqrt.pop %v853
      %v855 = vmul.f32 %v853, %v854
      %vm856 = vcmp.eq.f32.partialorder %v853, inf
      %v857 = vsel %vm856, %v853, %v855
      %vm858 = vcmp.eq.f32.partialorder %v853, 0.0
      %v859 = vand.u32 %v853, 2147483648
      %v860 = vsel %vm858, %v859, %v857
      %v861 = vmul.f32 %v849, %v860
      %v862 = vmax.f32 %v861, 1e-06
      %v863 = vrcp.pop %v862
      %v864 = vmul.f32 %v838, %v863
      %vm865 = vcmask 7168
      %866 = vst.msk [vmem:[%s192] sm:$0xff] %vm865, %v864
      %p867 = scmp.lt.s32.totalorder %s15, 1
      %s868 = scalar_select %p867, %s15, 1
      %s869 = smul.addr %s868, 8
      %s870 = scalar_lea.vmem %s4, %s869
      // Predicated region
      $region37: #{tpu_custom_call.1} parent=35 // pred_check
        %p871 = pneg %p122
      $region38: #{tpu_custom_call.1} parent=35 // pred_check_branch
        %873 = sbr.rel (%p871) target = $region40
      $region39: #{tpu_custom_call.1} parent=35 // pred_region
        _
      $region40: #{tpu_custom_call.1} parent=35 // pred_fallthru
        _
    $region36: #{tpu_custom_call.1} parent=5 // pred_fallthru
      _
    %p874 = scmp.le.s32.totalorder 2, %s10
    // Predicated region
    $region41: #{tpu_custom_call.1} parent=5 // pred_check
      %p875 = pneg %p874
    $region42: #{tpu_custom_call.1} parent=5 // pred_check_branch
      %877 = sbr.rel (%p875) target = $region44
    $region43: #{tpu_custom_call.1} parent=5 // pred_region
      %s878 = ssub.s32 %s10, 2
      // Predicated region
      $region45: #{tpu_custom_call.1} parent=43 // pred_check
        %p879 = pneg %p128
      $region46: #{tpu_custom_call.1} parent=43 // pred_check_branch
        %881 = sbr.rel (%p879) target = $region48
      $region47: #{tpu_custom_call.1} parent=43 // pred_region
        %p882 = scmp.lt.s32.totalorder %s16, 1
        %s883 = scalar_select %p882, %s16, 1
        %s884 = smul.addr %s883, 8
        %s885 = scalar_lea.vmem %s4, %s884
      $region48: #{tpu_custom_call.1} parent=43 // pred_fallthru
        _
    $region44: #{tpu_custom_call.1} parent=5 // pred_fallthru
      _
  $region6: #{tpu_custom_call.1} parent=0 // loop_footer
    %s14 = sadd.s32 1, %s10
  $region7: #{tpu_custom_call.1} parent=0 // loop_footer_branch
    %9 = sbr.rel target = $region3
  $region8: #{tpu_custom_call.1} parent=0 // loop_exit
    _

</llo_original>
